<compile_context>
chip_gen: v7x
topology: tpu7x:2x2x1
jax: 0.10.0
libtpu: 0.0.40
codegen_flags: <defaults>
</compile_context>

<pallas_src>
import jax
import jax.numpy as jnp
from jax.experimental import pallas as pl
from jax.experimental.pallas import tpu as pltpu


def _stop_loss_kernel(lens_ref, probs_ref, out_ref):
    # Cast to f32 in VMEM (v5e has no bf16 VPU/EUP; f32 compute is correct
    # and identical on v6e/v7x).
    p = probs_ref[...].astype(jnp.float32)              # (B, T) f32
    B, T = p.shape
    lens = lens_ref[...].astype(jnp.int32)               # (B, 1) i32

    # Time indices, broadcast against (B, 1) lens.
    idx = jax.lax.broadcasted_iota(jnp.int32, (B, T), dimension=1)

    # labels is exactly one-hot, so the BCE blend collapses to a select
    # followed by a single log (PyTorch's per-term clamp at -100 is preserved:
    # the select picks exactly one branch of the one-hot blend).
    x = jnp.where(idx == lens, p, 1.0 - p)               # p where label==1 else 1-p
    bce = -jnp.maximum(jnp.log(x), -100.0)

    # Mask as a select instead of a float multiply.
    # Note: if mel_lens[b] >= T the label row is silently all-zero and the
    # mask covers the whole row (PyTorch scatter_ would raise instead).
    contrib = jnp.where(idx <= lens, bce, 0.0)

    # (bce * mask).mean(dim=0).sum() == sum(masked bce) / B
    out_ref[0, 0] = jnp.sum(contrib) / jnp.float32(B)


def stop_loss(stop_probs, mel_lens):
    """stop_probs: (B, T) float (native dtype), mel_lens: (B, 1) int.

    Returns scalar f32 loss. No wrapper-side casts: the kernel reads the
    native dtype from HBM and does all arithmetic in f32 in VMEM.
    """
    out = pl.pallas_call(
        _stop_loss_kernel,
        out_shape=jax.ShapeDtypeStruct((1, 1), jnp.float32),
        in_specs=[
            pl.BlockSpec(memory_space=pltpu.MemorySpace.VMEM),   # mel_lens
            pl.BlockSpec(memory_space=pltpu.MemorySpace.VMEM),   # stop_probs
        ],
        out_specs=pl.BlockSpec(memory_space=pltpu.MemorySpace.SMEM),
    )(mel_lens, stop_probs)
    return out[0, 0]


def _stop_loss_ref(stop_probs, mel_lens):
    """Pure-JAX reference mirroring the PyTorch forward, for verification."""
    B, T = stop_probs.shape
    idx = jnp.arange(T, dtype=jnp.int32)[None, :]
    lens = mel_lens.astype(jnp.int32)                    # (B, 1)
    labels = (idx == lens).astype(jnp.float32)
    mask = (idx <= lens).astype(jnp.float32)
    p = stop_probs.astype(jnp.float32)
    bce = -(labels * jnp.maximum(jnp.log(p), -100.0)
            + (1.0 - labels) * jnp.maximum(jnp.log(1.0 - p), -100.0))
    return (bce * mask).mean(axis=0).sum()


if __name__ == "__main__":
    key = jax.random.PRNGKey(0)
    B, T = 2, 16
    k1, k2 = jax.random.split(key)
    # probabilities strictly in (0, 1) via sigmoid of random logits
    stop_probs = jax.nn.sigmoid(jax.random.normal(k1, (B, T), dtype=jnp.float32))
    mel_lens = jax.random.randint(k2, (B, 1), minval=0, maxval=T, dtype=jnp.int32)

    # f32 path: must match the PyTorch-style reference exactly.
    loss = jax.block_until_ready(stop_loss(stop_probs, mel_lens))
    ref = _stop_loss_ref(stop_probs, mel_lens)
    assert jnp.allclose(loss, ref, rtol=1e-5, atol=1e-5), (loss, ref)

    # native bf16 path (no wrapper cast -> half the HBM bytes DMA'd).
    sp_bf16 = stop_probs.astype(jnp.bfloat16)
    loss_bf16 = jax.block_until_ready(stop_loss(sp_bf16, mel_lens))
    ref_bf16 = _stop_loss_ref(sp_bf16.astype(jnp.float32), mel_lens)
    assert jnp.allclose(loss_bf16, ref_bf16, rtol=1e-3, atol=1e-3), (loss_bf16, ref_bf16)

    print("KERNEL_OK")
</pallas_src>

<mosaic_0001>
module attributes {stable_mosaic.version = 11 : i64} {
  func.func @_stop_loss_kernel(%arg0: memref<2x1xi32, #tpu.memory_space<vmem>>, %arg1: memref<2x16xf32, #tpu.memory_space<vmem>>, %arg2: memref<1x1xf32, #tpu.memory_space<smem>>) attributes {dimension_semantics = [], scalar_prefetch = 0 : i64, scratch_operands = 0 : i64, tpu.core_type = #tpu.core_type<tc>} {
    %c0 = arith.constant 0 : index
    %c0_0 = arith.constant 0 : index
    %0 = vector.load %arg1[%c0, %c0_0] : memref<2x16xf32, #tpu.memory_space<vmem>>, vector<2x16xf32>
    %c0_1 = arith.constant 0 : index
    %c0_2 = arith.constant 0 : index
    %1 = vector.load %arg0[%c0_1, %c0_2] : memref<2x1xi32, #tpu.memory_space<vmem>>, vector<2x1xi32>
    %2 = tpu.iota {dimensions = array<i32: 1>} : vector<2x16xi32>
    %3 = vector.broadcast %1 : vector<2x1xi32> to vector<2x16xi32>
    %4 = arith.cmpi eq, %2, %3 : vector<2x16xi32>
    %cst = arith.constant 1.000000e+00 : f32
    %5 = vector.broadcast %cst : f32 to vector<2x16xf32>
    %6 = arith.subf %5, %0 : vector<2x16xf32>
    %7 = arith.select %4, %0, %6 : vector<2x16xi1>, vector<2x16xf32>
    %8 = math.log %7 : vector<2x16xf32>
    %cst_3 = arith.constant -1.000000e+02 : f32
    %9 = vector.broadcast %cst_3 : f32 to vector<2x16xf32>
    %10 = arith.maximumf %8, %9 : vector<2x16xf32>
    %cst_4 = arith.constant 0.000000e+00 : f32
    %11 = vector.broadcast %cst_4 : f32 to vector<2x16xf32>
    %12 = arith.subf %11, %10 : vector<2x16xf32>
    %13 = vector.broadcast %1 : vector<2x1xi32> to vector<2x16xi32>
    %14 = arith.cmpi sle, %2, %13 : vector<2x16xi32>
    %cst_5 = arith.constant 0.000000e+00 : f32
    %15 = vector.broadcast %cst_5 : f32 to vector<2x16xf32>
    %16 = arith.select %14, %12, %15 : vector<2x16xi1>, vector<2x16xf32>
    %17 = vector.shape_cast %16 : vector<2x16xf32> to vector<1x2x16xf32>
    %cst_6 = arith.constant dense<0.000000e+00> : vector<1xf32>
    %18 = vector.multi_reduction <add>, %17, %cst_6 [1, 2] : vector<1x2x16xf32> to vector<1xf32>
    %19 = vector.shape_cast %18 : vector<1xf32> to vector<1x1x1xf32>
    %20 = vector.extract %19[0, 0, 0] : f32 from vector<1x1x1xf32>
    %cst_7 = arith.constant 2.000000e+00 : f32
    %21 = arith.divf %20, %cst_7 : f32
    %c0_8 = arith.constant 0 : index
    %c0_9 = arith.constant 0 : index
    %22 = memref.load %arg2[%c0_8, %c0_9] : memref<1x1xf32, #tpu.memory_space<smem>>
    memref.store %21, %arg2[%c0_8, %c0_9] : memref<1x1xf32, #tpu.memory_space<smem>>
    return
  }
}

</mosaic_0001>

<llo_original>
// kernel: tpu_custom_call.1
$region0: #{tpu_custom_call.1}
  #allocation0 [shape = 'u32[]', space=smem, size = 0x4, offset = 0x4, fixed_abs, tag = 'smem constant byte address 0x4 - core index']
  #allocation1 [shape = 'u32[144,128]{1,0:T(1,128)}', space=vmem, size = 0x12000, scoped, tag = 'internal scratch']
  %s0 = inlined_call_operand.vmem [shape: s32[2,1], index: 0, kind: input, shape index: {}]
  %s1 = inlined_call_operand.vmem [shape: f32[2,16], index: 1, kind: input, shape index: {}]
  %s2 = inlined_call_operand.hbm [shape: f32[1,1], index: 2, kind: output, shape index: {}]
  %s3 = sld [smem:[#allocation0]]
  $region18: #{tpu_custom_call.1} parent=0
    _
  %s5 = ssub.s32 1, %s3
  %s6 = scalar_select 0, %s5, %s3
  $region1: #{tpu_custom_call.1} parent=0
    #allocation2 [shape = 'u8[512]{0}', space=smem, size = 0x200, scoped, tag = 'output window, operand 0, single buffered']
    #allocation3 [shape = 's32[1]{0}', space=sflag, size = 0x4, scoped, tag = 'scoped memory for tpu_custom_call.1']
    %7 = vsyncpa [#allocation3], 0
    // Predicated region
    $region2: #{tpu_custom_call.1} parent=1 // pred_check
      _
    $region3: #{tpu_custom_call.1} parent=1 // pred_check_branch
      %9 = sbr.rel (0) target = $region5
    $region4: #{tpu_custom_call.1} parent=1 // pred_region
      _
    $region5: #{tpu_custom_call.1} parent=1 // pred_fallthru
      _
    // Predicated region
    $region6: #{tpu_custom_call.1} parent=1 // pred_check
      _
    $region7: #{tpu_custom_call.1} parent=1 // pred_check_branch
      %11 = sbr.rel (0) target = $region9
    $region8: #{tpu_custom_call.1} parent=1 // pred_region
      _
    $region9: #{tpu_custom_call.1} parent=1 // pred_fallthru
      _
    %v12 = vld [vmem:[%s1] sm:$0x3]
    %v13 = vld [vmem:[%s0] sm:$0x3]
    %v14 = vlaneseq
    %v15 = vand.u32 %v14, 127
    %16 = vset.pattern.permute.xlu0 0
    %17 = vperm.xlu0 %16, %v13
    %v18 = vpop.permute.xlu0 %17
    %vm19 = vcmp.eq.s32.totalorder %v15, %v18
    %v20 = vsub.f32 1.0, %v12
    %v21 = vsel %vm19, %v12, %v20
    %v22 = vlog2.pop %v21
    %v23 = vmul.f32 %v22, 0.6931472
    %v24 = vmax.f32 %v23, -100.0
    %v25 = vsub.f32 0.0, %v24
    %vm26 = vcmp.le.s32.totalorder %v15, %v18
    %v27 = vsel %vm26, %v25, 0.0
    %vm28 = vcmask 123904
    %v29 = vsel %vm28, %v27, 0.0
    %30 = vadd.xlane.f32.xlu0 %v29
    %v31 = vpop.xlane.xlu0 %30
    %v32 = vrot.slane %v31, 4
    %v33 = vadd.f32 %v31, %v32
    %v34 = vrot.slane %v33, 2
    %v35 = vadd.f32 %v33, %v34
    %v36 = vrot.slane %v35, 1
    %v37 = vadd.f32 %v35, %v36
    %s38 = vtos %v37
    %v39 = vrcp.pop 2.0
    %s40 = vtos %v39
    %s41 = smul.f32 %s38, %s40
    %s42 = scalar_lea.smem [#allocation2], 0
    %43 = sst [smem:[%s42]] %s41
    // Predicated region
    $region10: #{tpu_custom_call.1} parent=1 // pred_check
      _
    $region11: #{tpu_custom_call.1} parent=1 // pred_check_branch
      %45 = sbr.rel (0) target = $region13
    $region12: #{tpu_custom_call.1} parent=1 // pred_region
      %s47 = ssub.s32 16, 16
      %48 = vsyncadd [#allocation3], %s47
      %51 = dma.smem_to_hbm [#allocation2], 16, %s2, [#allocation3]
    $region13: #{tpu_custom_call.1} parent=1 // pred_fallthru
      _
    // Predicated region
    $region14: #{tpu_custom_call.1} parent=1 // pred_check
      _
    $region15: #{tpu_custom_call.1} parent=1 // pred_check_branch
      %53 = sbr.rel (0) target = $region17
    $region16: #{tpu_custom_call.1} parent=1 // pred_region
      %54 = dma.done [#allocation3], 16
    $region17: #{tpu_custom_call.1} parent=1 // pred_fallthru
      _
    %55 = sfence
    %56 = vsyncpa [#allocation3], 1

</llo_original>
